<compile_context>
chip_gen: v7x
topology: tpu7x:2x2x1
jax: 0.10.0
libtpu: 0.0.40
codegen_flags: <defaults>
</compile_context>

<pallas_src>
import functools

import jax
import jax.numpy as jnp
from jax.experimental import pallas as pl
from jax.experimental.pallas import tpu as pltpu

_ROW_ALIGN = 16  # bf16 sublane packing -> keep batch tiles multiples of 16


def _round_up(x: int, m: int) -> int:
    return ((x + m - 1) // m) * m


def _cdiv(a: int, b: int) -> int:
    return (a + b - 1) // b


def _vmem_capacity_bytes(default: int = 64 << 20) -> int:
    """Generation-aware VMEM capacity (v5e/v6e: 128 MiB, v7x: 64 MiB)."""
    try:
        info = pltpu.get_tpu_info()
        cap = getattr(info, "vmem_capacity_bytes", None)
        if cap:
            return int(cap)
    except Exception:
        pass
    return default


def _actor_kernel(max_action, h_pad, a_pad,
                  x_ref, w1_ref, w2_ref, w3_ref, w4_ref, b_ref, out_ref):
    """One batch tile of the 4-layer MLP.

    4 MXU matmuls (bf16 operands, f32 accumulation) fused with the f32
    bias-add / ReLU / tanh / scale epilogue, entirely in VMEM.
    """
    b = b_ref[...]                    # (4, P) f32, tiny
    x = x_ref[...]                    # (tb, state_dim) already bf16

    h = jnp.dot(x, w1_ref[...], preferred_element_type=jnp.float32)
    h = jnp.maximum(h + b[0:1, :h_pad], 0.0)

    h = jnp.dot(h.astype(jnp.bfloat16), w2_ref[...],
                preferred_element_type=jnp.float32)
    h = jnp.maximum(h + b[1:2, :h_pad], 0.0)

    h = jnp.dot(h.astype(jnp.bfloat16), w3_ref[...],
                preferred_element_type=jnp.float32)
    h = jnp.maximum(h + b[2:3, :h_pad], 0.0)

    h = jnp.dot(h.astype(jnp.bfloat16), w4_ref[...],
                preferred_element_type=jnp.float32)
    h = h + b[3:4, :a_pad]

    out_ref[...] = (max_action * jnp.tanh(h)).astype(out_ref.dtype)


def pack_params(params, state_dim, action_dim, hidden_dim):
    """Pad hidden/action dims to multiples of 128 (lane-dense), keep state_dim
    unpadded (short K is masked by Mosaic), cast weights to bf16, pack the four
    biases into one (4, P) f32 array. Zero padding is inert: padded weight
    columns and padded biases are zero, so padded channels stay exactly 0
    through ReLU/tanh."""
    h_pad = _round_up(hidden_dim, 128)
    a_pad = _round_up(action_dim, 128)
    p = max(h_pad, a_pad)

    def pad_w(w, rows, cols):
        return jnp.pad(w, ((0, rows - w.shape[0]),
                           (0, cols - w.shape[1]))).astype(jnp.bfloat16)

    def pad_b(bvec, cols):
        b2d = bvec.reshape(1, -1)
        return jnp.pad(b2d, ((0, 0), (0, cols - b2d.shape[1])))

    packed = {
        "w1": pad_w(params["w1"], state_dim, h_pad),   # K unpadded
        "w2": pad_w(params["w2"], h_pad, h_pad),
        "w3": pad_w(params["w3"], h_pad, h_pad),
        "w4": pad_w(params["w4"], h_pad, a_pad),
        "b": jnp.concatenate(
            [pad_b(params["b1"], p), pad_b(params["b2"], p),
             pad_b(params["b3"], p), pad_b(params["b4"], p)],
            axis=0).astype(jnp.float32),
    }
    return packed, (h_pad, a_pad)


def deterministic_actor_forward(state, packed, pads, action_dim,
                                max_action=1.0, tb_max=512,
                                out_dtype=jnp.float32, slice_output=True):
    """Pallas forward for DeterministicActor.

    state:  [B, state_dim] float32
    packed: output of pack_params (bf16 weights [in, out_pad], packed f32 biases)
    returns [B, action_dim] out_dtype (or the padded slab if slice_output=False)
    """
    h_pad, a_pad = pads
    B, state_dim = state.shape
    p = packed["b"].shape[1]

    # --- balanced batch tiling (no padding cliff; >=2 tiles for v7x 2 TCs) ---
    b_aligned = _round_up(max(B, 1), _ROW_ALIGN)
    min_tiles = 2 if b_aligned >= 2 * _ROW_ALIGN else 1
    n_tiles = max(min_tiles, _cdiv(b_aligned, tb_max))
    tb = _round_up(_cdiv(b_aligned, n_tiles), _ROW_ALIGN)
    grid_b = _cdiv(b_aligned, tb)
    b_padded = grid_b * tb

    # bf16 state with batch-only zero padding (fused pad + cast; no 128-padding
    # of the tiny state_dim).
    x = jnp.pad(state, ((0, b_padded - B), (0, 0))).astype(jnp.bfloat16)

    out_itemsize = jnp.dtype(out_dtype).itemsize

    # --- VMEM budget (generation-aware, with real headroom) ---
    # Resident operands (constant index_map -> single fetch), double-buffered
    # state/output streams, and in-kernel activation temporaries
    # (f32 h + bf16 recast copies), plus headroom for Mosaic internal scratch.
    # TODO(synk): K-tile w2/w3 (reduction grid axis + pl.when accumulator) if
    # hidden_dim grows so resident bf16 weights no longer fit the VMEM cap.
    w_bytes = sum(int(packed[k].size) * packed[k].dtype.itemsize
                  for k in ("w1", "w2", "w3", "w4"))
    b_bytes = int(packed["b"].size) * 4
    stream_bytes = 2 * (tb * state_dim * 2 + tb * a_pad * out_itemsize)
    tmp_bytes = 3 * tb * h_pad * 6
    need = w_bytes + b_bytes + stream_bytes + tmp_bytes + (8 << 20)
    cap = _vmem_capacity_bytes()
    vmem_limit = int(min(max(need, 16 << 20), int(0.85 * cap)))

    # --- advisory cost for XLA scheduling around the call ---
    flops = 2 * b_padded * (state_dim * h_pad + 2 * h_pad * h_pad + h_pad * a_pad)
    cost = pl.CostEstimate(
        flops=int(flops),
        transcendentals=int(b_padded * a_pad),
        bytes_accessed=int(x.size * 2 + w_bytes + b_bytes
                           + b_padded * a_pad * out_itemsize),
    )

    kernel = functools.partial(_actor_kernel, float(max_action), h_pad, a_pad)

    out = pl.pallas_call(
        kernel,
        out_shape=jax.ShapeDtypeStruct((b_padded, a_pad), out_dtype),
        grid=(grid_b,),
        in_specs=[
            pl.BlockSpec((tb, state_dim), lambda i: (i, 0)),      # state tile (streamed)
            pl.BlockSpec((state_dim, h_pad), lambda i: (0, 0)),   # w1 (resident)
            pl.BlockSpec((h_pad, h_pad), lambda i: (0, 0)),       # w2 (resident)
            pl.BlockSpec((h_pad, h_pad), lambda i: (0, 0)),       # w3 (resident)
            pl.BlockSpec((h_pad, a_pad), lambda i: (0, 0)),       # w4 (resident)
            pl.BlockSpec((4, p), lambda i: (0, 0)),               # packed biases
        ],
        out_specs=pl.BlockSpec((tb, a_pad), lambda i: (i, 0)),
        compiler_params=pltpu.CompilerParams(
            # TODO(synk): evaluate pltpu.CORE_PARALLEL on the batch axis for v7x.
            dimension_semantics=("parallel",),
            vmem_limit_bytes=vmem_limit),
        cost_estimate=cost,
    )(x, packed["w1"], packed["w2"], packed["w3"], packed["w4"], packed["b"])

    if slice_output:
        return out[:B, :action_dim]
    return out


def init_params(key, state_dim, action_dim, hidden_dim, edac_init=False):
    """Deterministic synthetic init (mimics nn.Linear uniform fan-in init).
    Weights are stored [in, out] (i.e. PyTorch W.T)."""
    dims = [(state_dim, hidden_dim), (hidden_dim, hidden_dim),
            (hidden_dim, hidden_dim), (hidden_dim, action_dim)]
    params = {}
    for i, (fan_in, fan_out) in enumerate(dims, start=1):
        key, kw, kb = jax.random.split(key, 3)
        bound = 1.0 / jnp.sqrt(fan_in)
        params[f"w{i}"] = jax.random.uniform(
            kw, (fan_in, fan_out), jnp.float32, -bound, bound)
        if edac_init and i < 4:
            params[f"b{i}"] = jnp.full((1, fan_out), 0.1, jnp.float32)
        else:
            params[f"b{i}"] = jax.random.uniform(
                kb, (1, fan_out), jnp.float32, -bound, bound)
    return params


def _reference_forward_f32(state, params, max_action):
    h = state
    for i in range(1, 4):
        h = jnp.maximum(h @ params[f"w{i}"] + params[f"b{i}"], 0.0)
    h = h @ params["w4"] + params["b4"]
    return max_action * jnp.tanh(h)


def _reference_forward_bf16(state, params, max_action):
    """Reference matching the kernel's numerics (bf16 operands, f32 accum)."""
    h = state.astype(jnp.float32)
    for i in range(1, 5):
        w = params[f"w{i}"].astype(jnp.bfloat16)
        h = jnp.dot(h.astype(jnp.bfloat16), w,
                    preferred_element_type=jnp.float32) + params[f"b{i}"]
        if i < 4:
            h = jnp.maximum(h, 0.0)
    return max_action * jnp.tanh(h)


if __name__ == "__main__":
    B, STATE_DIM, ACTION_DIM, HIDDEN_DIM = 8, 16, 8, 32
    MAX_ACTION = 1.0

    key = jax.random.PRNGKey(0)
    key, kx = jax.random.split(key)
    state = jax.random.normal(kx, (B, STATE_DIM), jnp.float32)
    params = init_params(key, STATE_DIM, ACTION_DIM, HIDDEN_DIM)

    packed, pads = pack_params(params, STATE_DIM, ACTION_DIM, HIDDEN_DIM)
    out = deterministic_actor_forward(state, packed, pads, ACTION_DIM, MAX_ACTION)
    out = jax.block_until_ready(out)

    ref_bf16 = _reference_forward_bf16(state, params, MAX_ACTION)
    ref_f32 = _reference_forward_f32(state, params, MAX_ACTION)

    assert out.shape == (B, ACTION_DIM)
    assert jnp.allclose(out, ref_bf16, atol=1e-3, rtol=1e-3), "mismatch vs bf16 ref"
    assert jnp.allclose(out, ref_f32, atol=3e-2, rtol=3e-2), "mismatch vs f32 ref"
    print("KERNEL_OK")
</pallas_src>

<mosaic_0001>
module attributes {stable_mosaic.version = 11 : i64} {
  func.func @_actor_kernel(%arg0: i32, %arg1: memref<16x16xbf16, #tpu.memory_space<vmem>>, %arg2: memref<16x128xbf16, #tpu.memory_space<vmem>>, %arg3: memref<128x128xbf16, #tpu.memory_space<vmem>>, %arg4: memref<128x128xbf16, #tpu.memory_space<vmem>>, %arg5: memref<128x128xbf16, #tpu.memory_space<vmem>>, %arg6: memref<4x128xf32, #tpu.memory_space<vmem>>, %arg7: memref<16x128xf32, #tpu.memory_space<vmem>>) attributes {dimension_semantics = [#tpu.dimension_semantics<parallel>], iteration_bounds = array<i64: 1>, scalar_prefetch = 0 : i64, scratch_operands = 0 : i64, tpu.core_type = #tpu.core_type<tc>, window_params = [{transform_indices = @transform_0, window_bounds = array<i64: 16, 16>}, {pipeline_mode = #tpu.pipeline_mode<synchronous>, transform_indices = @transform_1, window_bounds = array<i64: 16, 128>}, {pipeline_mode = #tpu.pipeline_mode<synchronous>, transform_indices = @transform_2, window_bounds = array<i64: 128, 128>}, {pipeline_mode = #tpu.pipeline_mode<synchronous>, transform_indices = @transform_3, window_bounds = array<i64: 128, 128>}, {pipeline_mode = #tpu.pipeline_mode<synchronous>, transform_indices = @transform_4, window_bounds = array<i64: 128, 128>}, {pipeline_mode = #tpu.pipeline_mode<synchronous>, transform_indices = @transform_5, window_bounds = array<i64: 4, 128>}, {transform_indices = @transform_6, window_bounds = array<i64: 16, 128>}]} {
    %c0 = arith.constant 0 : index
    %c0_0 = arith.constant 0 : index
    %0 = vector.load %arg6[%c0, %c0_0] : memref<4x128xf32, #tpu.memory_space<vmem>>, vector<4x128xf32>
    %c0_1 = arith.constant 0 : index
    %c0_2 = arith.constant 0 : index
    %1 = vector.load %arg1[%c0_1, %c0_2] : memref<16x16xbf16, #tpu.memory_space<vmem>>, vector<16x16xbf16>
    %c0_3 = arith.constant 0 : index
    %c0_4 = arith.constant 0 : index
    %2 = vector.load %arg2[%c0_3, %c0_4] : memref<16x128xbf16, #tpu.memory_space<vmem>>, vector<16x128xbf16>
    %cst = arith.constant dense<0.000000e+00> : vector<16x128xf32>
    %3 = tpu.matmul %1, %2, %cst {dimension_numbers = #tpu.dot_dimension_numbers<[1], [0], [0], [1], [0, 0, 1, 1], [], []>} : vector<16x16xbf16>, vector<16x128xbf16>, vector<16x128xf32> -> vector<16x128xf32>
    %4 = vector.extract_strided_slice %0 {offsets = [0, 0], sizes = [1, 128], strides = [1, 1]} : vector<4x128xf32> to vector<1x128xf32>
    %5 = vector.broadcast %4 : vector<1x128xf32> to vector<16x128xf32>
    %6 = arith.addf %3, %5 : vector<16x128xf32>
    %cst_5 = arith.constant 0.000000e+00 : f32
    %7 = vector.broadcast %cst_5 : f32 to vector<16x128xf32>
    %8 = arith.maximumf %6, %7 : vector<16x128xf32>
    %9 = arith.truncf %8 : vector<16x128xf32> to vector<16x128xbf16>
    %c0_6 = arith.constant 0 : index
    %c0_7 = arith.constant 0 : index
    %10 = vector.load %arg3[%c0_6, %c0_7] : memref<128x128xbf16, #tpu.memory_space<vmem>>, vector<128x128xbf16>
    %cst_8 = arith.constant dense<0.000000e+00> : vector<16x128xf32>
    %11 = tpu.matmul %9, %10, %cst_8 {dimension_numbers = #tpu.dot_dimension_numbers<[1], [0], [0], [1], [0, 0, 1, 1], [], []>} : vector<16x128xbf16>, vector<128x128xbf16>, vector<16x128xf32> -> vector<16x128xf32>
    %12 = vector.extract_strided_slice %0 {offsets = [1, 0], sizes = [1, 128], strides = [1, 1]} : vector<4x128xf32> to vector<1x128xf32>
    %13 = vector.broadcast %12 : vector<1x128xf32> to vector<16x128xf32>
    %14 = arith.addf %11, %13 : vector<16x128xf32>
    %cst_9 = arith.constant 0.000000e+00 : f32
    %15 = vector.broadcast %cst_9 : f32 to vector<16x128xf32>
    %16 = arith.maximumf %14, %15 : vector<16x128xf32>
    %17 = arith.truncf %16 : vector<16x128xf32> to vector<16x128xbf16>
    %c0_10 = arith.constant 0 : index
    %c0_11 = arith.constant 0 : index
    %18 = vector.load %arg4[%c0_10, %c0_11] : memref<128x128xbf16, #tpu.memory_space<vmem>>, vector<128x128xbf16>
    %cst_12 = arith.constant dense<0.000000e+00> : vector<16x128xf32>
    %19 = tpu.matmul %17, %18, %cst_12 {dimension_numbers = #tpu.dot_dimension_numbers<[1], [0], [0], [1], [0, 0, 1, 1], [], []>} : vector<16x128xbf16>, vector<128x128xbf16>, vector<16x128xf32> -> vector<16x128xf32>
    %20 = vector.extract_strided_slice %0 {offsets = [2, 0], sizes = [1, 128], strides = [1, 1]} : vector<4x128xf32> to vector<1x128xf32>
    %21 = vector.broadcast %20 : vector<1x128xf32> to vector<16x128xf32>
    %22 = arith.addf %19, %21 : vector<16x128xf32>
    %cst_13 = arith.constant 0.000000e+00 : f32
    %23 = vector.broadcast %cst_13 : f32 to vector<16x128xf32>
    %24 = arith.maximumf %22, %23 : vector<16x128xf32>
    %25 = arith.truncf %24 : vector<16x128xf32> to vector<16x128xbf16>
    %c0_14 = arith.constant 0 : index
    %c0_15 = arith.constant 0 : index
    %26 = vector.load %arg5[%c0_14, %c0_15] : memref<128x128xbf16, #tpu.memory_space<vmem>>, vector<128x128xbf16>
    %cst_16 = arith.constant dense<0.000000e+00> : vector<16x128xf32>
    %27 = tpu.matmul %25, %26, %cst_16 {dimension_numbers = #tpu.dot_dimension_numbers<[1], [0], [0], [1], [0, 0, 1, 1], [], []>} : vector<16x128xbf16>, vector<128x128xbf16>, vector<16x128xf32> -> vector<16x128xf32>
    %28 = vector.extract_strided_slice %0 {offsets = [3, 0], sizes = [1, 128], strides = [1, 1]} : vector<4x128xf32> to vector<1x128xf32>
    %29 = vector.broadcast %28 : vector<1x128xf32> to vector<16x128xf32>
    %30 = arith.addf %27, %29 : vector<16x128xf32>
    %31 = math.tanh %30 : vector<16x128xf32>
    %cst_17 = arith.constant 1.000000e+00 : f32
    %32 = vector.broadcast %cst_17 : f32 to vector<16x128xf32>
    %33 = arith.mulf %32, %31 : vector<16x128xf32>
    %c0_18 = arith.constant 0 : index
    %c0_19 = arith.constant 0 : index
    %34 = vector.load %arg7[%c0_18, %c0_19] : memref<16x128xf32, #tpu.memory_space<vmem>>, vector<16x128xf32>
    tpu.vector_store %arg7[%c0_18, %c0_19], %33 {strides = array<i32>} : memref<16x128xf32, #tpu.memory_space<vmem>>, vector<16x128xf32>,
    return
  }
  func.func @transform_0(%arg0: i32) -> (i32, i32) {
    %c0_i32 = arith.constant 0 : i32
    %c0_i32_0 = arith.constant 0 : i32
    return %arg0, %c0_i32 : i32, i32
  }
  func.func @transform_1(%arg0: i32) -> (i32, i32) {
    %c0_i32 = arith.constant 0 : i32
    %c0_i32_0 = arith.constant 0 : i32
    %c0_i32_1 = arith.constant 0 : i32
    return %c0_i32, %c0_i32_0 : i32, i32
  }
  func.func @transform_2(%arg0: i32) -> (i32, i32) {
    %c0_i32 = arith.constant 0 : i32
    %c0_i32_0 = arith.constant 0 : i32
    %c0_i32_1 = arith.constant 0 : i32
    return %c0_i32, %c0_i32_0 : i32, i32
  }
  func.func @transform_3(%arg0: i32) -> (i32, i32) {
    %c0_i32 = arith.constant 0 : i32
    %c0_i32_0 = arith.constant 0 : i32
    %c0_i32_1 = arith.constant 0 : i32
    return %c0_i32, %c0_i32_0 : i32, i32
  }
  func.func @transform_4(%arg0: i32) -> (i32, i32) {
    %c0_i32 = arith.constant 0 : i32
    %c0_i32_0 = arith.constant 0 : i32
    %c0_i32_1 = arith.constant 0 : i32
    return %c0_i32, %c0_i32_0 : i32, i32
  }
  func.func @transform_5(%arg0: i32) -> (i32, i32) {
    %c0_i32 = arith.constant 0 : i32
    %c0_i32_0 = arith.constant 0 : i32
    %c0_i32_1 = arith.constant 0 : i32
    return %c0_i32, %c0_i32_0 : i32, i32
  }
  func.func @transform_6(%arg0: i32) -> (i32, i32) {
    %c0_i32 = arith.constant 0 : i32
    %c0_i32_0 = arith.constant 0 : i32
    return %arg0, %c0_i32 : i32, i32
  }
}

</mosaic_0001>

<llo_original>
// kernel: tpu_custom_call.1
$region0: #{tpu_custom_call.1}
  #allocation0 [shape = 'u32[]', space=smem, size = 0x4, offset = 0x4, fixed_abs, tag = 'smem constant byte address 0x4 - core index']
  #allocation1 [shape = 'u32[144,128]{1,0:T(1,128)}', space=vmem, size = 0x12000, scoped, tag = 'internal scratch']
  %s0 = inlined_call_operand.hbm [shape: bf16[16,16], index: 0, kind: input, shape index: {}]
  %s1 = inlined_call_operand.hbm [shape: bf16[16,128], index: 1, kind: input, shape index: {}]
  %s2 = inlined_call_operand.hbm [shape: bf16[128,128], index: 2, kind: input, shape index: {}]
  %s3 = inlined_call_operand.hbm [shape: bf16[128,128], index: 3, kind: input, shape index: {}]
  %s4 = inlined_call_operand.hbm [shape: bf16[128,128], index: 4, kind: input, shape index: {}]
  %s5 = inlined_call_operand.vmem [shape: f32[4,128], index: 5, kind: input, shape index: {}]
  %s6 = inlined_call_operand.hbm [shape: f32[16,128], index: 6, kind: output, shape index: {}]
  %s7 = sld [smem:[#allocation0]]
  $region54: #{tpu_custom_call.1} parent=0
    _
  %s9 = ssub.s32 1, %s7
  %s10 = scalar_select 0, %s9, %s7
  $region1: #{tpu_custom_call.1} parent=0
    #allocation2 [shape = 'u8[4096]{0}', space=vmem, size = 0x1000, scoped, tag = 'input window, operand 0, single buffered']
    #allocation3 [shape = 's32[1]{0}', space=sflag, size = 0x4, scoped, tag = 'scoped memory for tpu_custom_call.1']
    #allocation4 [shape = 's32[1]{0}', space=sflag, size = 0x4, scoped, tag = 'scoped memory for tpu_custom_call.1']
    #allocation5 [shape = 'u8[4096]{0}', space=vmem, size = 0x1000, scoped, tag = 'input window, operand 1, single buffered']
    #allocation6 [shape = 's32[1]{0}', space=sflag, size = 0x4, scoped, tag = 'scoped memory for tpu_custom_call.1']
    #allocation7 [shape = 'u8[32768]{0}', space=vmem, size = 0x8000, scoped, tag = 'input window, operand 2, single buffered']
    #allocation8 [shape = 'u8[32768]{0}', space=vmem, size = 0x8000, scoped, tag = 'input window, operand 3, single buffered']
    #allocation9 [shape = 's32[1]{0}', space=sflag, size = 0x4, scoped, tag = 'scoped memory for tpu_custom_call.1']
    #allocation10 [shape = 'u8[32768]{0}', space=vmem, size = 0x8000, scoped, tag = 'input window, operand 4, single buffered']
    #allocation11 [shape = 'u8[8192]{0}', space=vmem, size = 0x2000, scoped, tag = 'output window, operand 0, single buffered']
    %11 = vsyncpa [#allocation3], 0
    %12 = vsyncpa [#allocation6], 0
    %13 = vsyncpa [#allocation9], 0
    %14 = vsyncpa [#allocation4], 0
    // Predicated region
    $region2: #{tpu_custom_call.1} parent=1 // pred_check
      _
    $region3: #{tpu_custom_call.1} parent=1 // pred_check_branch
      %16 = sbr.rel (0) target = $region5
    $region4: #{tpu_custom_call.1} parent=1 // pred_region
      %s18 = ssub.s32 128, 128
      %19 = vsyncadd [#allocation3], %s18
      %s20 = sshll.u32 [#allocation2], 4
      %s21 = int_to_ptr.vmem [resolvable:$true] %s20
      %26 = dma.hbm_to_vmem [thread:$0]  %s0, 128, %s21, [#allocation3], 64, 64, 4
    $region5: #{tpu_custom_call.1} parent=1 // pred_fallthru
      _
    // Predicated region
    $region6: #{tpu_custom_call.1} parent=1 // pred_check
      _
    $region7: #{tpu_custom_call.1} parent=1 // pred_check_branch
      %28 = sbr.rel (0) target = $region9
    $region8: #{tpu_custom_call.1} parent=1 // pred_region
      %s30 = ssub.s32 128, 128
      %31 = vsyncadd [#allocation6], %s30
      %s32 = sshll.u32 [#allocation5], 4
      %s33 = int_to_ptr.vmem [resolvable:$true] %s32
      %38 = dma.hbm_to_vmem [thread:$0]  %s1, 128, %s33, [#allocation6], 64, 64, 4
    $region9: #{tpu_custom_call.1} parent=1 // pred_fallthru
      _
    // Predicated region
    $region10: #{tpu_custom_call.1} parent=1 // pred_check
      _
    $region11: #{tpu_custom_call.1} parent=1 // pred_check_branch
      %40 = sbr.rel (0) target = $region13
    $region12: #{tpu_custom_call.1} parent=1 // pred_region
      %s42 = ssub.s32 1024, 1024
      %43 = vsyncadd [#allocation6], %s42
      %s44 = sshll.u32 [#allocation7], 4
      %s45 = int_to_ptr.vmem [resolvable:$true] %s44
      %50 = dma.hbm_to_vmem [thread:$0]  %s2, 1024, %s45, [#allocation6], 64, 64, 4
    $region13: #{tpu_custom_call.1} parent=1 // pred_fallthru
      _
    // Predicated region
    $region14: #{tpu_custom_call.1} parent=1 // pred_check
      _
    $region15: #{tpu_custom_call.1} parent=1 // pred_check_branch
      %52 = sbr.rel (0) target = $region17
    $region16: #{tpu_custom_call.1} parent=1 // pred_region
      %s54 = ssub.s32 1024, 1024
      %55 = vsyncadd [#allocation9], %s54
      %s56 = sshll.u32 [#allocation8], 4
      %s57 = int_to_ptr.vmem [resolvable:$true] %s56
      %62 = dma.hbm_to_vmem [thread:$0]  %s3, 1024, %s57, [#allocation9], 64, 64, 4
    $region17: #{tpu_custom_call.1} parent=1 // pred_fallthru
      _
    // Predicated region
    $region18: #{tpu_custom_call.1} parent=1 // pred_check
      _
    $region19: #{tpu_custom_call.1} parent=1 // pred_check_branch
      %64 = sbr.rel (0) target = $region21
    $region20: #{tpu_custom_call.1} parent=1 // pred_region
      %s66 = ssub.s32 1024, 1024
      %67 = vsyncadd [#allocation9], %s66
      %s68 = sshll.u32 [#allocation10], 4
      %s69 = int_to_ptr.vmem [resolvable:$true] %s68
      %74 = dma.hbm_to_vmem [thread:$0]  %s4, 1024, %s69, [#allocation9], 64, 64, 4
    $region21: #{tpu_custom_call.1} parent=1 // pred_fallthru
      _
    // Predicated region
    $region22: #{tpu_custom_call.1} parent=1 // pred_check
      _
    $region23: #{tpu_custom_call.1} parent=1 // pred_check_branch
      %76 = sbr.rel (0) target = $region25
    $region24: #{tpu_custom_call.1} parent=1 // pred_region
      _
    $region25: #{tpu_custom_call.1} parent=1 // pred_fallthru
      _
    // Predicated region
    $region26: #{tpu_custom_call.1} parent=1 // pred_check
      _
    $region27: #{tpu_custom_call.1} parent=1 // pred_check_branch
      %78 = sbr.rel (0) target = $region29
    $region28: #{tpu_custom_call.1} parent=1 // pred_region
      %79 = dma.done [#allocation3], 128
    $region29: #{tpu_custom_call.1} parent=1 // pred_fallthru
      _
    // Predicated region
    $region30: #{tpu_custom_call.1} parent=1 // pred_check
      _
    $region31: #{tpu_custom_call.1} parent=1 // pred_check_branch
      %81 = sbr.rel (0) target = $region33
    $region32: #{tpu_custom_call.1} parent=1 // pred_region
      %82 = dma.done [#allocation6], 128
    $region33: #{tpu_custom_call.1} parent=1 // pred_fallthru
      _
    // Predicated region
    $region34: #{tpu_custom_call.1} parent=1 // pred_check
      _
    $region35: #{tpu_custom_call.1} parent=1 // pred_check_branch
      %84 = sbr.rel (0) target = $region37
    $region36: #{tpu_custom_call.1} parent=1 // pred_region
      %85 = dma.done [#allocation6], 1024
    $region37: #{tpu_custom_call.1} parent=1 // pred_fallthru
      _
    // Predicated region
    $region38: #{tpu_custom_call.1} parent=1 // pred_check
      _
    $region39: #{tpu_custom_call.1} parent=1 // pred_check_branch
      %87 = sbr.rel (0) target = $region41
    $region40: #{tpu_custom_call.1} parent=1 // pred_region
      %88 = dma.done [#allocation9], 1024
    $region41: #{tpu_custom_call.1} parent=1 // pred_fallthru
      _
    // Predicated region
    $region42: #{tpu_custom_call.1} parent=1 // pred_check
      _
    $region43: #{tpu_custom_call.1} parent=1 // pred_check_branch
      %90 = sbr.rel (0) target = $region45
    $region44: #{tpu_custom_call.1} parent=1 // pred_region
      %91 = dma.done [#allocation9], 1024
    $region45: #{tpu_custom_call.1} parent=1 // pred_fallthru
      _
    %v93 = vld [vmem:[%s5] sm:$0xf]
    %v94 = vld [vmem:[#allocation2] sm:$0xf]
    %v95 = vld [vmem:[#allocation2 + $0x4] sm:$0xf]
    %v96 = vld [vmem:[#allocation5] sm:$0xf]
    %v97 = vld [vmem:[#allocation5 + $0x4] sm:$0xf]
    %v98 = vlaneseq
    %v99 = vshrl.u32 %v98, 7
    %v100 = vsub.s32 0, %v99
    %v101 = vrot.slane %v93, %v100
    %v104 = vunpack.c.l.b16 %v94
    %v105 = vunpack.c.l.b16 %v95
    %v106 = vpack.c.b16 %v105, %v104
    %v109 = vunpack.c.l.b16 %v96
    %v110 = vunpack.c.l.b16 %v97
    %v111 = vpack.c.b16 %v110, %v109
    %vm113 = vcmask 130048
    %v115 = vsel %vm113, %v106, 0
    %117 = vmatprep.subr.bf16.mxu0 0
    %118 = vmatpush1.bf16.msra.mxu0 %v111
    %119 = vmatprep.subr.bf16.mxu0 0
    %120 = vmatpush1.bf16.msra.mxu0 0
    %121 = vmatprep.subr.bf16.mxu0 0
    %122 = vmatpush1.bf16.msra.mxu0 0
    %123 = vmatprep.subr.bf16.mxu0 0
    %124 = vmatpush1.bf16.msra.mxu0 0
    %125 = vmatprep.subr.bf16.mxu0 0
    %126 = vmatpush1.bf16.msra.mxu0 0
    %127 = vmatprep.subr.bf16.mxu0 0
    %128 = vmatpush1.bf16.msra.mxu0 0
    %129 = vmatprep.subr.bf16.mxu0 0
    %130 = vmatpush1.bf16.msra.mxu0 0
    %131 = vmatprep.subr.bf16.mxu0 0
    %132 = vmatpush1.bf16.msra.mxu0 0
    %133 = vmatprep.subr.bf16.mxu0 0
    %134 = vmatpush1.bf16.msra.mxu0 0
    %135 = vmatprep.subr.bf16.mxu0 0
    %136 = vmatpush1.bf16.msra.mxu0 0
    %137 = vmatprep.subr.bf16.mxu0 0
    %138 = vmatpush1.bf16.msra.mxu0 0
    %139 = vmatprep.subr.bf16.mxu0 0
    %140 = vmatpush1.bf16.msra.mxu0 0
    %141 = vmatprep.subr.bf16.mxu0 0
    %142 = vmatpush1.bf16.msra.mxu0 0
    %143 = vmatprep.subr.bf16.mxu0 0
    %144 = vmatpush1.bf16.msra.mxu0 0
    %145 = vmatprep.subr.bf16.mxu0 0
    %146 = vmatpush1.bf16.msra.mxu0 0
    %147 = vmatprep.subr.bf16.mxu0 0
    %148 = vmatpush1.bf16.msra.mxu0 0
    %149 = vmatprep.mubr.bf16.mxu0 0
    %150 = vmatmul.mubr.bf16.gmra.mrb[0].mxu0 %v115
    %v151 = vpop.f32.mrb[0].mxu0
    %v152 = vadd.f32 %v101, %v151
    %v153 = vpop.f32.mrb[0].mxu0
    %v154 = vpop.f32.mrb[0].mxu0
    %v155 = vadd.f32 %v101, %v154
    %v156 = vpop.f32.mrb[0].mxu0
    %157 = vdwg.mxu0
    %v158 = vmax.f32 %v152, 0.0
    %v159 = vmax.f32 %v155, 0.0
    %v160 = vpack.c.bf16 %v159, %v158
    %v161 = vld [vmem:[#allocation7] sm:$0xf]
    %v162 = vld [vmem:[#allocation7 + $0x4] sm:$0xf]
    %v163 = vld [vmem:[#allocation7 + $0x8] sm:$0xf]
    %v164 = vld [vmem:[#allocation7 + $0xc] sm:$0xf]
    %v165 = vld [vmem:[#allocation7 + $0x10] sm:$0xf]
    %v166 = vld [vmem:[#allocation7 + $0x14] sm:$0xf]
    %v167 = vld [vmem:[#allocation7 + $0x18] sm:$0xf]
    %v168 = vld [vmem:[#allocation7 + $0x1c] sm:$0xf]
    %v169 = vld [vmem:[#allocation7 + $0x20] sm:$0xf]
    %v170 = vld [vmem:[#allocation7 + $0x24] sm:$0xf]
    %v171 = vld [vmem:[#allocation7 + $0x28] sm:$0xf]
    %v172 = vld [vmem:[#allocation7 + $0x2c] sm:$0xf]
    %v173 = vld [vmem:[#allocation7 + $0x30] sm:$0xf]
    %v174 = vld [vmem:[#allocation7 + $0x34] sm:$0xf]
    %v175 = vld [vmem:[#allocation7 + $0x38] sm:$0xf]
    %v176 = vld [vmem:[#allocation7 + $0x3c] sm:$0xf]
    %v177 = vlaneseq
    %v178 = vshrl.u32 %v177, 7
    %v179 = vsub.s32 1, %v178
    %v180 = vrot.slane %v93, %v179
    %v197 = vunpack.c.l.b16 %v161
    %v198 = vunpack.c.l.b16 %v162
    %v199 = vunpack.c.l.b16 %v163
    %v200 = vunpack.c.l.b16 %v164
    %v201 = vunpack.c.l.b16 %v165
    %v202 = vunpack.c.l.b16 %v166
    %v203 = vunpack.c.l.b16 %v167
    %v204 = vunpack.c.l.b16 %v168
    %v205 = vunpack.c.l.b16 %v169
    %v206 = vunpack.c.l.b16 %v170
    %v207 = vunpack.c.l.b16 %v171
    %v208 = vunpack.c.l.b16 %v172
    %v209 = vunpack.c.l.b16 %v173
    %v210 = vunpack.c.l.b16 %v174
    %v211 = vunpack.c.l.b16 %v175
    %v212 = vunpack.c.l.b16 %v176
    %v213 = vpack.c.b16 %v198, %v197
    %v214 = vpack.c.b16 %v200, %v199
    %v215 = vpack.c.b16 %v202, %v201
    %v216 = vpack.c.b16 %v204, %v203
    %v217 = vpack.c.b16 %v206, %v205
    %v218 = vpack.c.b16 %v208, %v207
    %v219 = vpack.c.b16 %v210, %v209
    %v220 = vpack.c.b16 %v212, %v211
    %229 = vmatprep.subr.bf16.mxu0 0
    %230 = vmatpush1.bf16.msra.mxu0 %v213
    %231 = vmatprep.subr.bf16.mxu0 0
    %232 = vmatpush1.bf16.msra.mxu0 %v214
    %233 = vmatprep.subr.bf16.mxu0 0
    %234 = vmatpush1.bf16.msra.mxu0 %v215
    %235 = vmatprep.subr.bf16.mxu0 0
    %236 = vmatpush1.bf16.msra.mxu0 %v216
    %237 = vmatprep.subr.bf16.mxu0 0
    %238 = vmatpush1.bf16.msra.mxu0 %v217
    %239 = vmatprep.subr.bf16.mxu0 0
    %240 = vmatpush1.bf16.msra.mxu0 %v218
    %241 = vmatprep.subr.bf16.mxu0 0
    %242 = vmatpush1.bf16.msra.mxu0 %v219
    %243 = vmatprep.subr.bf16.mxu0 0
    %244 = vmatpush1.bf16.msra.mxu0 %v220
    %245 = vmatprep.subr.bf16.mxu0 0
    %246 = vmatpush1.bf16.msra.mxu0 0
    %247 = vmatprep.subr.bf16.mxu0 0
    %248 = vmatpush1.bf16.msra.mxu0 0
    %249 = vmatprep.subr.bf16.mxu0 0
    %250 = vmatpush1.bf16.msra.mxu0 0
    %251 = vmatprep.subr.bf16.mxu0 0
    %252 = vmatpush1.bf16.msra.mxu0 0
    %253 = vmatprep.subr.bf16.mxu0 0
    %254 = vmatpush1.bf16.msra.mxu0 0
    %255 = vmatprep.subr.bf16.mxu0 0
    %256 = vmatpush1.bf16.msra.mxu0 0
    %257 = vmatprep.subr.bf16.mxu0 0
    %258 = vmatpush1.bf16.msra.mxu0 0
    %259 = vmatprep.subr.bf16.mxu0 0
    %260 = vmatpush1.bf16.msra.mxu0 0
    %261 = vmatprep.mubr.bf16.mxu0 0
    %262 = vmatmul.mubr.bf16.gmra.mrb[0].mxu0 %v160
    %v263 = vpop.f32.mrb[0].mxu0
    %v264 = vadd.f32 %v180, %v263
    %v265 = vpop.f32.mrb[0].mxu0
    %v266 = vpop.f32.mrb[0].mxu0
    %v267 = vadd.f32 %v180, %v266
    %v268 = vpop.f32.mrb[0].mxu0
    %269 = vdwg.mxu0
    %v270 = vmax.f32 %v264, 0.0
    %v271 = vmax.f32 %v267, 0.0
    %v272 = vpack.c.bf16 %v271, %v270
    %v273 = vld [vmem:[#allocation8] sm:$0xf]
    %v274 = vld [vmem:[#allocation8 + $0x4] sm:$0xf]
    %v275 = vld [vmem:[#allocation8 + $0x8] sm:$0xf]
    %v276 = vld [vmem:[#allocation8 + $0xc] sm:$0xf]
    %v277 = vld [vmem:[#allocation8 + $0x10] sm:$0xf]
    %v278 = vld [vmem:[#allocation8 + $0x14] sm:$0xf]
    %v279 = vld [vmem:[#allocation8 + $0x18] sm:$0xf]
    %v280 = vld [vmem:[#allocation8 + $0x1c] sm:$0xf]
    %v281 = vld [vmem:[#allocation8 + $0x20] sm:$0xf]
    %v282 = vld [vmem:[#allocation8 + $0x24] sm:$0xf]
    %v283 = vld [vmem:[#allocation8 + $0x28] sm:$0xf]
    %v284 = vld [vmem:[#allocation8 + $0x2c] sm:$0xf]
    %v285 = vld [vmem:[#allocation8 + $0x30] sm:$0xf]
    %v286 = vld [vmem:[#allocation8 + $0x34] sm:$0xf]
    %v287 = vld [vmem:[#allocation8 + $0x38] sm:$0xf]
    %v288 = vld [vmem:[#allocation8 + $0x3c] sm:$0xf]
    %v289 = vlaneseq
    %v290 = vshrl.u32 %v289, 7
    %v291 = vsub.s32 2, %v290
    %v292 = vrot.slane %v93, %v291
    %v309 = vunpack.c.l.b16 %v273
    %v310 = vunpack.c.l.b16 %v274
    %v311 = vunpack.c.l.b16 %v275
    %v312 = vunpack.c.l.b16 %v276
    %v313 = vunpack.c.l.b16 %v277
    %v314 = vunpack.c.l.b16 %v278
    %v315 = vunpack.c.l.b16 %v279
    %v316 = vunpack.c.l.b16 %v280
    %v317 = vunpack.c.l.b16 %v281
    %v318 = vunpack.c.l.b16 %v282
    %v319 = vunpack.c.l.b16 %v283
    %v320 = vunpack.c.l.b16 %v284
    %v321 = vunpack.c.l.b16 %v285
    %v322 = vunpack.c.l.b16 %v286
    %v323 = vunpack.c.l.b16 %v287
    %v324 = vunpack.c.l.b16 %v288
    %v325 = vpack.c.b16 %v310, %v309
    %v326 = vpack.c.b16 %v312, %v311
    %v327 = vpack.c.b16 %v314, %v313
    %v328 = vpack.c.b16 %v316, %v315
    %v329 = vpack.c.b16 %v318, %v317
    %v330 = vpack.c.b16 %v320, %v319
    %v331 = vpack.c.b16 %v322, %v321
    %v332 = vpack.c.b16 %v324, %v323
    %341 = vmatprep.subr.bf16.mxu0 0
    %342 = vmatpush1.bf16.msra.mxu0 %v325
    %343 = vmatprep.subr.bf16.mxu0 0
    %344 = vmatpush1.bf16.msra.mxu0 %v326
    %345 = vmatprep.subr.bf16.mxu0 0
    %346 = vmatpush1.bf16.msra.mxu0 %v327
    %347 = vmatprep.subr.bf16.mxu0 0
    %348 = vmatpush1.bf16.msra.mxu0 %v328
    %349 = vmatprep.subr.bf16.mxu0 0
    %350 = vmatpush1.bf16.msra.mxu0 %v329
    %351 = vmatprep.subr.bf16.mxu0 0
    %352 = vmatpush1.bf16.msra.mxu0 %v330
    %353 = vmatprep.subr.bf16.mxu0 0
    %354 = vmatpush1.bf16.msra.mxu0 %v331
    %355 = vmatprep.subr.bf16.mxu0 0
    %356 = vmatpush1.bf16.msra.mxu0 %v332
    %357 = vmatprep.subr.bf16.mxu0 0
    %358 = vmatpush1.bf16.msra.mxu0 0
    %359 = vmatprep.subr.bf16.mxu0 0
    %360 = vmatpush1.bf16.msra.mxu0 0
    %361 = vmatprep.subr.bf16.mxu0 0
    %362 = vmatpush1.bf16.msra.mxu0 0
    %363 = vmatprep.subr.bf16.mxu0 0
    %364 = vmatpush1.bf16.msra.mxu0 0
    %365 = vmatprep.subr.bf16.mxu0 0
    %366 = vmatpush1.bf16.msra.mxu0 0
    %367 = vmatprep.subr.bf16.mxu0 0
    %368 = vmatpush1.bf16.msra.mxu0 0
    %369 = vmatprep.subr.bf16.mxu0 0
    %370 = vmatpush1.bf16.msra.mxu0 0
    %371 = vmatprep.subr.bf16.mxu0 0
    %372 = vmatpush1.bf16.msra.mxu0 0
    %373 = vmatprep.mubr.bf16.mxu0 0
    %374 = vmatmul.mubr.bf16.gmra.mrb[0].mxu0 %v272
    %v375 = vpop.f32.mrb[0].mxu0
    %v376 = vadd.f32 %v292, %v375
    %v377 = vpop.f32.mrb[0].mxu0
    %v378 = vpop.f32.mrb[0].mxu0
    %v379 = vadd.f32 %v292, %v378
    %v380 = vpop.f32.mrb[0].mxu0
    %381 = vdwg.mxu0
    %v382 = vmax.f32 %v376, 0.0
    %v383 = vmax.f32 %v379, 0.0
    %v384 = vpack.c.bf16 %v383, %v382
    %v385 = vld [vmem:[#allocation10] sm:$0xf]
    %v386 = vld [vmem:[#allocation10 + $0x4] sm:$0xf]
    %v387 = vld [vmem:[#allocation10 + $0x8] sm:$0xf]
    %v388 = vld [vmem:[#allocation10 + $0xc] sm:$0xf]
    %v389 = vld [vmem:[#allocation10 + $0x10] sm:$0xf]
    %v390 = vld [vmem:[#allocation10 + $0x14] sm:$0xf]
    %v391 = vld [vmem:[#allocation10 + $0x18] sm:$0xf]
    %v392 = vld [vmem:[#allocation10 + $0x1c] sm:$0xf]
    %v393 = vld [vmem:[#allocation10 + $0x20] sm:$0xf]
    %v394 = vld [vmem:[#allocation10 + $0x24] sm:$0xf]
    %v395 = vld [vmem:[#allocation10 + $0x28] sm:$0xf]
    %v396 = vld [vmem:[#allocation10 + $0x2c] sm:$0xf]
    %v397 = vld [vmem:[#allocation10 + $0x30] sm:$0xf]
    %v398 = vld [vmem:[#allocation10 + $0x34] sm:$0xf]
    %v399 = vld [vmem:[#allocation10 + $0x38] sm:$0xf]
    %v400 = vld [vmem:[#allocation10 + $0x3c] sm:$0xf]
    %v401 = vlaneseq
    %v402 = vshrl.u32 %v401, 7
    %v403 = vsub.s32 3, %v402
    %v404 = vrot.slane %v93, %v403
    %v421 = vunpack.c.l.b16 %v385
    %v422 = vunpack.c.l.b16 %v386
    %v423 = vunpack.c.l.b16 %v387
    %v424 = vunpack.c.l.b16 %v388
    %v425 = vunpack.c.l.b16 %v389
    %v426 = vunpack.c.l.b16 %v390
    %v427 = vunpack.c.l.b16 %v391
    %v428 = vunpack.c.l.b16 %v392
    %v429 = vunpack.c.l.b16 %v393
    %v430 = vunpack.c.l.b16 %v394
    %v431 = vunpack.c.l.b16 %v395
    %v432 = vunpack.c.l.b16 %v396
    %v433 = vunpack.c.l.b16 %v397
    %v434 = vunpack.c.l.b16 %v398
    %v435 = vunpack.c.l.b16 %v399
    %v436 = vunpack.c.l.b16 %v400
    %v437 = vpack.c.b16 %v422, %v421
    %v438 = vpack.c.b16 %v424, %v423
    %v439 = vpack.c.b16 %v426, %v425
    %v440 = vpack.c.b16 %v428, %v427
    %v441 = vpack.c.b16 %v430, %v429
    %v442 = vpack.c.b16 %v432, %v431
    %v443 = vpack.c.b16 %v434, %v433
    %v444 = vpack.c.b16 %v436, %v435
    %453 = vmatprep.subr.bf16.mxu0 0
    %454 = vmatpush1.bf16.msra.mxu0 %v437
    %455 = vmatprep.subr.bf16.mxu0 0
    %456 = vmatpush1.bf16.msra.mxu0 %v438
    %457 = vmatprep.subr.bf16.mxu0 0
    %458 = vmatpush1.bf16.msra.mxu0 %v439
    %459 = vmatprep.subr.bf16.mxu0 0
    %460 = vmatpush1.bf16.msra.mxu0 %v440
    %461 = vmatprep.subr.bf16.mxu0 0
    %462 = vmatpush1.bf16.msra.mxu0 %v441
    %463 = vmatprep.subr.bf16.mxu0 0
    %464 = vmatpush1.bf16.msra.mxu0 %v442
    %465 = vmatprep.subr.bf16.mxu0 0
    %466 = vmatpush1.bf16.msra.mxu0 %v443
    %467 = vmatprep.subr.bf16.mxu0 0
    %468 = vmatpush1.bf16.msra.mxu0 %v444
    %469 = vmatprep.subr.bf16.mxu0 0
    %470 = vmatpush1.bf16.msra.mxu0 0
    %471 = vmatprep.subr.bf16.mxu0 0
    %472 = vmatpush1.bf16.msra.mxu0 0
    %473 = vmatprep.subr.bf16.mxu0 0
    %474 = vmatpush1.bf16.msra.mxu0 0
    %475 = vmatprep.subr.bf16.mxu0 0
    %476 = vmatpush1.bf16.msra.mxu0 0
    %477 = vmatprep.subr.bf16.mxu0 0
    %478 = vmatpush1.bf16.msra.mxu0 0
    %479 = vmatprep.subr.bf16.mxu0 0
    %480 = vmatpush1.bf16.msra.mxu0 0
    %481 = vmatprep.subr.bf16.mxu0 0
    %482 = vmatpush1.bf16.msra.mxu0 0
    %483 = vmatprep.subr.bf16.mxu0 0
    %484 = vmatpush1.bf16.msra.mxu0 0
    %485 = vmatprep.mubr.bf16.mxu0 0
    %486 = vmatmul.mubr.bf16.gmra.mrb[0].mxu0 %v384
    %v487 = vpop.f32.mrb[0].mxu0
    %v488 = vadd.f32 %v404, %v487
    %v489 = vpop.f32.mrb[0].mxu0
    %v490 = vpop.f32.mrb[0].mxu0
    %v491 = vadd.f32 %v404, %v490
    %v492 = vpop.f32.mrb[0].mxu0
    %493 = vdwg.mxu0
    %v494 = vtanh.pop %v488
    %v495 = vtanh.pop %v491
    %496 = vst [vmem:[#allocation11] sm:$0xff] %v494
    %497 = vst [vmem:[#allocation11 + $0x8] sm:$0xff] %v495
    // Predicated region
    $region46: #{tpu_custom_call.1} parent=1 // pred_check
      _
    $region47: #{tpu_custom_call.1} parent=1 // pred_check_branch
      %499 = sbr.rel (0) target = $region49
    $region48: #{tpu_custom_call.1} parent=1 // pred_region
      %s501 = ssub.s32 256, 256
      %502 = vsyncadd [#allocation4], %s501
      %s503 = sshll.u32 [#allocation11], 4
      %s504 = int_to_ptr.vmem [resolvable:$true] %s503
      %509 = dma.vmem_to_hbm [thread:$0]  %s504, 256, %s6, [#allocation4], 128, 128, 8
    $region49: #{tpu_custom_call.1} parent=1 // pred_fallthru
      _
    // Predicated region
    $region50: #{tpu_custom_call.1} parent=1 // pred_check
      _
    $region51: #{tpu_custom_call.1} parent=1 // pred_check_branch
      %511 = sbr.rel (0) target = $region53
    $region52: #{tpu_custom_call.1} parent=1 // pred_region
      %512 = dma.done [#allocation4], 256
    $region53: #{tpu_custom_call.1} parent=1 // pred_fallthru
      _
    %513 = vsyncpa [#allocation3], 1
    %514 = vsyncpa [#allocation6], 1
    %515 = vsyncpa [#allocation9], 1
    %516 = vsyncpa [#allocation4], 1

</llo_original>
